<compile_context>
chip_gen: v7x
topology: tpu7x:2x2x1
jax: 0.10.0
libtpu: 0.0.40
codegen_flags: <defaults>
</compile_context>

<pallas_src>
import jax
import jax.numpy as jnp
from jax import lax
from jax.experimental import pallas as pl
from jax.experimental.pallas import tpu as pltpu


def _round_up(n, m):
    return ((n + m - 1) // m) * m


# ---------------------------------------------------------------------------
# Kernel
# ---------------------------------------------------------------------------
def td3_value_kernel(s_ref, a_ref, *refs):
    """refs = [w0_state, w0_action, b0, (w_i, b_i)..., wh8, bh8, out_ref]."""
    out_ref = refs[-1]
    prm = refs[:-1]

    w0s = prm[0][...]
    w0a = prm[1][...]
    b0 = prm[2][...]                     # (1, 2h0) f32
    h = (jnp.dot(s_ref[...], w0s, preferred_element_type=jnp.float32)
         + jnp.dot(a_ref[...], w0a, preferred_element_type=jnp.float32)
         + b0)
    h = jnp.maximum(h, 0.0)              # ReLU stays f32 (v5e-safe epilogue)

    mids = prm[3:-2]
    for i in range(len(mids) // 2):
        w = mids[2 * i][...]             # block-diag (2h_prev, 2h)
        b = mids[2 * i + 1][...]         # (1, 2h) f32
        h = jnp.dot(h.astype(w.dtype), w,
                    preferred_element_type=jnp.float32) + b
        h = jnp.maximum(h, 0.0)

    wh = prm[-2][...]                    # (8, 2*h_last): row0=q1 head, row1=q2 head
    bh = prm[-1][...]                    # (8, 1) f32
    # (8, 2h) x (tile, 2h) contracting the hidden dim -> (8, tile) transposed,
    # lane-dense output slab (q1 in row 0, q2 in row 1).
    out = lax.dot_general(wh, h.astype(wh.dtype),
                          dimension_numbers=(((1,), (1,)), ((), ())),
                          preferred_element_type=jnp.float32)
    out_ref[...] = out + bh


# ---------------------------------------------------------------------------
# One-time parameter fusing (call at init, reuse every forward step)
# ---------------------------------------------------------------------------
def fuse_params(p, state_dim, dot_dtype=jnp.float32):
    (w1_0, b1_0) = p["q1_layers"][0]
    (w2_0, b2_0) = p["q2_layers"][0]
    w0 = jnp.concatenate([w1_0, w2_0], axis=1)            # (in_dim, 2h0)
    fused = {
        "w0_state": w0[:state_dim].astype(dot_dtype),      # (state_dim, 2h0)
        "w0_action": w0[state_dim:].astype(dot_dtype),     # (action_dim, 2h0)
        "b0": jnp.concatenate([b1_0, b2_0], axis=1).astype(jnp.float32),
        "mid": [],
    }
    for (w1, b1), (w2, b2) in zip(p["q1_layers"][1:], p["q2_layers"][1:]):
        z12 = jnp.zeros((w1.shape[0], w2.shape[1]), jnp.float32)
        z21 = jnp.zeros((w2.shape[0], w1.shape[1]), jnp.float32)
        w = jnp.block([[w1, z12], [z21, w2]])              # block-diagonal
        b = jnp.concatenate([b1, b2], axis=1)
        fused["mid"].append((w.astype(dot_dtype), b.astype(jnp.float32)))

    h_last = p["q1_layers"][-1][0].shape[1]
    wh = jnp.zeros((8, 2 * h_last), jnp.float32)
    wh = wh.at[0, :h_last].set(p["q1_head_w"][:, 0])
    wh = wh.at[1, h_last:].set(p["q2_head_w"][:, 0])
    bh = jnp.zeros((8, 1), jnp.float32)
    bh = bh.at[0, 0].set(p["q1_head_b"][0, 0])
    bh = bh.at[1, 0].set(p["q2_head_b"][0, 0])
    fused["wh"] = wh.astype(dot_dtype)
    fused["bh"] = bh
    return fused


# ---------------------------------------------------------------------------
# Wrapper
# ---------------------------------------------------------------------------
def td3_value_forward(state, action, fused, *, batch_tile=1024):
    """Returns (q1, q2), each (B, 1) float32."""
    B, state_dim = state.shape
    action_dim = action.shape[1]
    dot_dtype = fused["w0_state"].dtype

    # Tile: multiple of 128 (legal + lane-dense transposed output block),
    # big enough to amortize per-step overhead, small enough that the
    # "parallel" batch axis has >= 2 programs when B permits (v7x megacore).
    tile = min(batch_tile, max(128, _round_up(pl.cdiv(B, 2), 128)))
    B_pad = _round_up(B, tile)
    pad = B_pad - B

    s = state.astype(dot_dtype)
    a = action.astype(dot_dtype)
    if pad:
        s = jnp.pad(s, ((0, pad), (0, 0)))
        a = jnp.pad(a, ((0, pad), (0, 0)))

    flat = [fused["w0_state"], fused["w0_action"], fused["b0"]]
    for w, b in fused["mid"]:
        flat += [w, b]
    flat += [fused["wh"], fused["bh"]]

    in_specs = [pl.BlockSpec((tile, state_dim), lambda i: (i, 0)),
                pl.BlockSpec((tile, action_dim), lambda i: (i, 0))]
    in_specs += [pl.BlockSpec(p.shape, lambda i: (0, 0)) for p in flat]

    out = pl.pallas_call(
        td3_value_kernel,
        grid=(B_pad // tile,),
        in_specs=in_specs,
        out_specs=pl.BlockSpec((8, tile), lambda i: (0, i)),
        out_shape=jax.ShapeDtypeStruct((8, B_pad), jnp.float32),
        compiler_params=pltpu.CompilerParams(
            dimension_semantics=("parallel",)),      # megacore sharding on v7x
    )(s, a, *flat)

    q1 = out[0, :B][:, None]
    q2 = out[1, :B][:, None]
    return q1, q2


# ---------------------------------------------------------------------------
# Parameters + pure-JAX reference (un-fused two-tower math)
# ---------------------------------------------------------------------------
def make_params(key, state_dim, action_dim, hidden_layers_dim):
    in_dim = state_dim + action_dim
    dims = [in_dim] + list(hidden_layers_dim)
    n = len(hidden_layers_dim)
    ks = jax.random.split(key, 2 * n + 2)

    def lin(k, fan_in, fan_out):
        bound = 1.0 / (fan_in ** 0.5)
        kw, kb = jax.random.split(k)
        w = jax.random.uniform(kw, (fan_in, fan_out), jnp.float32, -bound, bound)
        b = jax.random.uniform(kb, (1, fan_out), jnp.float32, -bound, bound)
        return w, b

    q1_layers = [lin(ks[i], dims[i], dims[i + 1]) for i in range(n)]
    q2_layers = [lin(ks[n + i], dims[i], dims[i + 1]) for i in range(n)]
    q1_head = lin(ks[2 * n], dims[-1], 1)
    q2_head = lin(ks[2 * n + 1], dims[-1], 1)
    return {"q1_layers": q1_layers, "q2_layers": q2_layers,
            "q1_head_w": q1_head[0], "q1_head_b": q1_head[1],
            "q2_head_w": q2_head[0], "q2_head_b": q2_head[1]}


def reference_forward(state, action, p):
    x = jnp.concatenate([state, action], axis=1).astype(jnp.float32)
    h1 = x
    h2 = x
    for (w1, b1), (w2, b2) in zip(p["q1_layers"], p["q2_layers"]):
        h1 = jax.nn.relu(h1 @ w1 + b1)
        h2 = jax.nn.relu(h2 @ w2 + b2)
    q1 = h1 @ p["q1_head_w"] + p["q1_head_b"]
    q2 = h2 @ p["q2_head_w"] + p["q2_head_b"]
    return q1, q2


if __name__ == "__main__":
    import numpy as np

    key = jax.random.PRNGKey(0)
    k_s, k_a, k_p = jax.random.split(key, 3)

    batch = 16
    state_dim = 24
    action_dim = 8
    hidden_layers_dim = [64, 64]

    state = jax.random.normal(k_s, (batch, state_dim), jnp.float32)
    action = jax.random.normal(k_a, (batch, action_dim), jnp.float32)
    params = make_params(k_p, state_dim, action_dim, hidden_layers_dim)

    q1_ref, q2_ref = reference_forward(state, action, params)

    # f32 path — exact match to reference.
    fused_f32 = fuse_params(params, state_dim, dot_dtype=jnp.float32)
    q1, q2 = td3_value_forward(state, action, fused_f32)
    jax.block_until_ready((q1, q2))
    np.testing.assert_allclose(np.asarray(q1), np.asarray(q1_ref), rtol=1e-5, atol=1e-5)
    np.testing.assert_allclose(np.asarray(q2), np.asarray(q2_ref), rtol=1e-5, atol=1e-5)

    # bf16 MXU-operand path (valid on v5e/v6e/v7x) — loose tolerance.
    fused_bf16 = fuse_params(params, state_dim, dot_dtype=jnp.bfloat16)
    q1b, q2b = td3_value_forward(state, action, fused_bf16)
    jax.block_until_ready((q1b, q2b))
    np.testing.assert_allclose(np.asarray(q1b), np.asarray(q1_ref), rtol=5e-2, atol=5e-2)
    np.testing.assert_allclose(np.asarray(q2b), np.asarray(q2_ref), rtol=5e-2, atol=5e-2)

    print("KERNEL_OK")
</pallas_src>

<mosaic_0001>
module attributes {stable_mosaic.version = 11 : i64} {
  func.func @td3_value_kernel(%arg0: i32, %arg1: memref<128x24xf32, #tpu.memory_space<vmem>>, %arg2: memref<128x8xf32, #tpu.memory_space<vmem>>, %arg3: memref<24x128xf32, #tpu.memory_space<vmem>>, %arg4: memref<8x128xf32, #tpu.memory_space<vmem>>, %arg5: memref<1x128xf32, #tpu.memory_space<vmem>>, %arg6: memref<128x128xf32, #tpu.memory_space<vmem>>, %arg7: memref<1x128xf32, #tpu.memory_space<vmem>>, %arg8: memref<8x128xf32, #tpu.memory_space<vmem>>, %arg9: memref<8x1xf32, #tpu.memory_space<vmem>>, %arg10: memref<8x128xf32, #tpu.memory_space<vmem>>) attributes {dimension_semantics = [#tpu.dimension_semantics<parallel>], iteration_bounds = array<i64: 1>, scalar_prefetch = 0 : i64, scratch_operands = 0 : i64, tpu.core_type = #tpu.core_type<tc>, window_params = [{transform_indices = @transform_0, window_bounds = array<i64: 128, 24>}, {transform_indices = @transform_1, window_bounds = array<i64: 128, 8>}, {pipeline_mode = #tpu.pipeline_mode<synchronous>, transform_indices = @transform_2, window_bounds = array<i64: 24, 128>}, {pipeline_mode = #tpu.pipeline_mode<synchronous>, transform_indices = @transform_3, window_bounds = array<i64: 8, 128>}, {pipeline_mode = #tpu.pipeline_mode<synchronous>, transform_indices = @transform_4, window_bounds = array<i64: 1, 128>}, {pipeline_mode = #tpu.pipeline_mode<synchronous>, transform_indices = @transform_5, window_bounds = array<i64: 128, 128>}, {pipeline_mode = #tpu.pipeline_mode<synchronous>, transform_indices = @transform_6, window_bounds = array<i64: 1, 128>}, {pipeline_mode = #tpu.pipeline_mode<synchronous>, transform_indices = @transform_7, window_bounds = array<i64: 8, 128>}, {pipeline_mode = #tpu.pipeline_mode<synchronous>, transform_indices = @transform_8, window_bounds = array<i64: 8, 1>}, {transform_indices = @transform_9, window_bounds = array<i64: 8, 128>}]} {
    %c0 = arith.constant 0 : index
    %c0_0 = arith.constant 0 : index
    %0 = vector.load %arg3[%c0, %c0_0] : memref<24x128xf32, #tpu.memory_space<vmem>>, vector<24x128xf32>
    %c0_1 = arith.constant 0 : index
    %c0_2 = arith.constant 0 : index
    %1 = vector.load %arg4[%c0_1, %c0_2] : memref<8x128xf32, #tpu.memory_space<vmem>>, vector<8x128xf32>
    %c0_3 = arith.constant 0 : index
    %c0_4 = arith.constant 0 : index
    %2 = vector.load %arg5[%c0_3, %c0_4] : memref<1x128xf32, #tpu.memory_space<vmem>>, vector<1x128xf32>
    %c0_5 = arith.constant 0 : index
    %c0_6 = arith.constant 0 : index
    %3 = vector.load %arg1[%c0_5, %c0_6] : memref<128x24xf32, #tpu.memory_space<vmem>>, vector<128x24xf32>
    %cst = arith.constant dense<0.000000e+00> : vector<128x128xf32>
    %4 = tpu.matmul %3, %0, %cst {dimension_numbers = #tpu.dot_dimension_numbers<[1], [0], [0], [1], [0, 0, 1, 1], [], []>} : vector<128x24xf32>, vector<24x128xf32>, vector<128x128xf32> -> vector<128x128xf32>
    %c0_7 = arith.constant 0 : index
    %c0_8 = arith.constant 0 : index
    %5 = vector.load %arg2[%c0_7, %c0_8] : memref<128x8xf32, #tpu.memory_space<vmem>>, vector<128x8xf32>
    %cst_9 = arith.constant dense<0.000000e+00> : vector<128x128xf32>
    %6 = tpu.matmul %5, %1, %cst_9 {dimension_numbers = #tpu.dot_dimension_numbers<[1], [0], [0], [1], [0, 0, 1, 1], [], []>} : vector<128x8xf32>, vector<8x128xf32>, vector<128x128xf32> -> vector<128x128xf32>
    %7 = arith.addf %4, %6 : vector<128x128xf32>
    %8 = vector.broadcast %2 : vector<1x128xf32> to vector<128x128xf32>
    %9 = arith.addf %7, %8 : vector<128x128xf32>
    %cst_10 = arith.constant 0.000000e+00 : f32
    %10 = vector.broadcast %cst_10 : f32 to vector<128x128xf32>
    %11 = arith.maximumf %9, %10 : vector<128x128xf32>
    %c0_11 = arith.constant 0 : index
    %c0_12 = arith.constant 0 : index
    %12 = vector.load %arg6[%c0_11, %c0_12] : memref<128x128xf32, #tpu.memory_space<vmem>>, vector<128x128xf32>
    %c0_13 = arith.constant 0 : index
    %c0_14 = arith.constant 0 : index
    %13 = vector.load %arg7[%c0_13, %c0_14] : memref<1x128xf32, #tpu.memory_space<vmem>>, vector<1x128xf32>
    %cst_15 = arith.constant dense<0.000000e+00> : vector<128x128xf32>
    %14 = tpu.matmul %11, %12, %cst_15 {dimension_numbers = #tpu.dot_dimension_numbers<[1], [0], [0], [1], [0, 0, 1, 1], [], []>} : vector<128x128xf32>, vector<128x128xf32>, vector<128x128xf32> -> vector<128x128xf32>
    %15 = vector.broadcast %13 : vector<1x128xf32> to vector<128x128xf32>
    %16 = arith.addf %14, %15 : vector<128x128xf32>
    %cst_16 = arith.constant 0.000000e+00 : f32
    %17 = vector.broadcast %cst_16 : f32 to vector<128x128xf32>
    %18 = arith.maximumf %16, %17 : vector<128x128xf32>
    %c0_17 = arith.constant 0 : index
    %c0_18 = arith.constant 0 : index
    %19 = vector.load %arg8[%c0_17, %c0_18] : memref<8x128xf32, #tpu.memory_space<vmem>>, vector<8x128xf32>
    %c0_19 = arith.constant 0 : index
    %c0_20 = arith.constant 0 : index
    %20 = vector.load %arg9[%c0_19, %c0_20] : memref<8x1xf32, #tpu.memory_space<vmem>>, vector<8x1xf32>
    %cst_21 = arith.constant dense<0.000000e+00> : vector<8x128xf32>
    %21 = tpu.matmul %19, %18, %cst_21 {dimension_numbers = #tpu.dot_dimension_numbers<[1], [1], [0], [0], [0, 0, 1, 0], [], []>} : vector<8x128xf32>, vector<128x128xf32>, vector<8x128xf32> -> vector<8x128xf32>
    %22 = vector.broadcast %20 : vector<8x1xf32> to vector<8x128xf32>
    %23 = arith.addf %21, %22 : vector<8x128xf32>
    %c0_22 = arith.constant 0 : index
    %c0_23 = arith.constant 0 : index
    %24 = vector.load %arg10[%c0_22, %c0_23] : memref<8x128xf32, #tpu.memory_space<vmem>>, vector<8x128xf32>
    tpu.vector_store %arg10[%c0_22, %c0_23], %23 {strides = array<i32>} : memref<8x128xf32, #tpu.memory_space<vmem>>, vector<8x128xf32>,
    return
  }
  func.func @transform_0(%arg0: i32) -> (i32, i32) {
    %c0_i32 = arith.constant 0 : i32
    %c0_i32_0 = arith.constant 0 : i32
    return %arg0, %c0_i32 : i32, i32
  }
  func.func @transform_1(%arg0: i32) -> (i32, i32) {
    %c0_i32 = arith.constant 0 : i32
    %c0_i32_0 = arith.constant 0 : i32
    return %arg0, %c0_i32 : i32, i32
  }
  func.func @transform_2(%arg0: i32) -> (i32, i32) {
    %c0_i32 = arith.constant 0 : i32
    %c0_i32_0 = arith.constant 0 : i32
    %c0_i32_1 = arith.constant 0 : i32
    return %c0_i32, %c0_i32_0 : i32, i32
  }
  func.func @transform_3(%arg0: i32) -> (i32, i32) {
    %c0_i32 = arith.constant 0 : i32
    %c0_i32_0 = arith.constant 0 : i32
    %c0_i32_1 = arith.constant 0 : i32
    return %c0_i32, %c0_i32_0 : i32, i32
  }
  func.func @transform_4(%arg0: i32) -> (i32, i32) {
    %c0_i32 = arith.constant 0 : i32
    %c0_i32_0 = arith.constant 0 : i32
    %c0_i32_1 = arith.constant 0 : i32
    return %c0_i32, %c0_i32_0 : i32, i32
  }
  func.func @transform_5(%arg0: i32) -> (i32, i32) {
    %c0_i32 = arith.constant 0 : i32
    %c0_i32_0 = arith.constant 0 : i32
    %c0_i32_1 = arith.constant 0 : i32
    return %c0_i32, %c0_i32_0 : i32, i32
  }
  func.func @transform_6(%arg0: i32) -> (i32, i32) {
    %c0_i32 = arith.constant 0 : i32
    %c0_i32_0 = arith.constant 0 : i32
    %c0_i32_1 = arith.constant 0 : i32
    return %c0_i32, %c0_i32_0 : i32, i32
  }
  func.func @transform_7(%arg0: i32) -> (i32, i32) {
    %c0_i32 = arith.constant 0 : i32
    %c0_i32_0 = arith.constant 0 : i32
    %c0_i32_1 = arith.constant 0 : i32
    return %c0_i32, %c0_i32_0 : i32, i32
  }
  func.func @transform_8(%arg0: i32) -> (i32, i32) {
    %c0_i32 = arith.constant 0 : i32
    %c0_i32_0 = arith.constant 0 : i32
    %c0_i32_1 = arith.constant 0 : i32
    return %c0_i32, %c0_i32_0 : i32, i32
  }
  func.func @transform_9(%arg0: i32) -> (i32, i32) {
    %c0_i32 = arith.constant 0 : i32
    %c0_i32_0 = arith.constant 0 : i32
    return %c0_i32, %arg0 : i32, i32
  }
}

</mosaic_0001>

<llo_original>
// kernel: tpu_custom_call.1
$region0: #{tpu_custom_call.1}
  #allocation0 [shape = 'u32[]', space=smem, size = 0x4, offset = 0x4, fixed_abs, tag = 'smem constant byte address 0x4 - core index']
  #allocation1 [shape = 'u32[144,128]{1,0:T(1,128)}', space=vmem, size = 0x12000, scoped, tag = 'internal scratch']
  %s0 = inlined_call_operand.vmem [shape: f32[128,24], index: 0, kind: input, shape index: {}]
  %s1 = inlined_call_operand.vmem [shape: f32[128,8], index: 1, kind: input, shape index: {}]
  %s2 = inlined_call_operand.vmem [shape: f32[24,128], index: 2, kind: input, shape index: {}]
  %s3 = inlined_call_operand.vmem [shape: f32[8,128], index: 3, kind: input, shape index: {}]
  %s4 = inlined_call_operand.vmem [shape: f32[1,128], index: 4, kind: input, shape index: {}]
  %s5 = inlined_call_operand.vmem [shape: f32[128,128], index: 5, kind: input, shape index: {}]
  %s6 = inlined_call_operand.vmem [shape: f32[1,128], index: 6, kind: input, shape index: {}]
  %s7 = inlined_call_operand.vmem [shape: f32[8,128], index: 7, kind: input, shape index: {}]
  %s8 = inlined_call_operand.vmem [shape: f32[8,1], index: 8, kind: input, shape index: {}]
  %s9 = inlined_call_operand.hbm [shape: f32[8,128], index: 9, kind: output, shape index: {}]
  %s10 = sld [smem:[#allocation0]]
  $region46: #{tpu_custom_call.1} parent=0
    _
  %s12 = ssub.s32 1, %s10
  %s13 = scalar_select 0, %s12, %s10
  $region1: #{tpu_custom_call.1} parent=0
    #allocation2 [shape = 'u8[4096]{0}', space=vmem, size = 0x1000, scoped, tag = 'output window, operand 0, single buffered']
    #allocation3 [shape = 's32[1]{0}', space=sflag, size = 0x4, scoped, tag = 'scoped memory for tpu_custom_call.1']
    %14 = vsyncpa [#allocation3], 0
    // Predicated region
    $region2: #{tpu_custom_call.1} parent=1 // pred_check
      _
    $region3: #{tpu_custom_call.1} parent=1 // pred_check_branch
      %16 = sbr.rel (0) target = $region5
    $region4: #{tpu_custom_call.1} parent=1 // pred_region
      _
    $region5: #{tpu_custom_call.1} parent=1 // pred_fallthru
      _
    // Predicated region
    $region6: #{tpu_custom_call.1} parent=1 // pred_check
      _
    $region7: #{tpu_custom_call.1} parent=1 // pred_check_branch
      %18 = sbr.rel (0) target = $region9
    $region8: #{tpu_custom_call.1} parent=1 // pred_region
      _
    $region9: #{tpu_custom_call.1} parent=1 // pred_fallthru
      _
    // Predicated region
    $region10: #{tpu_custom_call.1} parent=1 // pred_check
      _
    $region11: #{tpu_custom_call.1} parent=1 // pred_check_branch
      %20 = sbr.rel (0) target = $region13
    $region12: #{tpu_custom_call.1} parent=1 // pred_region
      _
    $region13: #{tpu_custom_call.1} parent=1 // pred_fallthru
      _
    // Predicated region
    $region14: #{tpu_custom_call.1} parent=1 // pred_check
      _
    $region15: #{tpu_custom_call.1} parent=1 // pred_check_branch
      %22 = sbr.rel (0) target = $region17
    $region16: #{tpu_custom_call.1} parent=1 // pred_region
      _
    $region17: #{tpu_custom_call.1} parent=1 // pred_fallthru
      _
    // Predicated region
    $region18: #{tpu_custom_call.1} parent=1 // pred_check
      _
    $region19: #{tpu_custom_call.1} parent=1 // pred_check_branch
      %24 = sbr.rel (0) target = $region21
    $region20: #{tpu_custom_call.1} parent=1 // pred_region
      _
    $region21: #{tpu_custom_call.1} parent=1 // pred_fallthru
      _
    // Predicated region
    $region22: #{tpu_custom_call.1} parent=1 // pred_check
      _
    $region23: #{tpu_custom_call.1} parent=1 // pred_check_branch
      %26 = sbr.rel (0) target = $region25
    $region24: #{tpu_custom_call.1} parent=1 // pred_region
      _
    $region25: #{tpu_custom_call.1} parent=1 // pred_fallthru
      _
    // Predicated region
    $region26: #{tpu_custom_call.1} parent=1 // pred_check
      _
    $region27: #{tpu_custom_call.1} parent=1 // pred_check_branch
      %28 = sbr.rel (0) target = $region29
    $region28: #{tpu_custom_call.1} parent=1 // pred_region
      _
    $region29: #{tpu_custom_call.1} parent=1 // pred_fallthru
      _
    // Predicated region
    $region30: #{tpu_custom_call.1} parent=1 // pred_check
      _
    $region31: #{tpu_custom_call.1} parent=1 // pred_check_branch
      %30 = sbr.rel (0) target = $region33
    $region32: #{tpu_custom_call.1} parent=1 // pred_region
      _
    $region33: #{tpu_custom_call.1} parent=1 // pred_fallthru
      _
    // Predicated region
    $region34: #{tpu_custom_call.1} parent=1 // pred_check
      _
    $region35: #{tpu_custom_call.1} parent=1 // pred_check_branch
      %32 = sbr.rel (0) target = $region37
    $region36: #{tpu_custom_call.1} parent=1 // pred_region
      _
    $region37: #{tpu_custom_call.1} parent=1 // pred_fallthru
      _
    %v33 = vld [vmem:[%s2] sm:$0xff]
    %v34 = vld [vmem:[%s2 + $0x8] sm:$0xff]
    %v35 = vld [vmem:[%s2 + $0x10] sm:$0xff]
    %v36 = vld [vmem:[%s3] sm:$0xff]
    %v37 = vld [vmem:[%s4] sm:$0x1]
    %v38 = vld [vmem:[%s0] sm:$0xff]
    %v39 = vld [vmem:[%s0 + $0x8] sm:$0xff]
    %v40 = vld [vmem:[%s0 + $0x10] sm:$0xff]
    %v41 = vld [vmem:[%s0 + $0x18] sm:$0xff]
    %v42 = vld [vmem:[%s0 + $0x20] sm:$0xff]
    %v43 = vld [vmem:[%s0 + $0x28] sm:$0xff]
    %v44 = vld [vmem:[%s0 + $0x30] sm:$0xff]
    %v45 = vld [vmem:[%s0 + $0x38] sm:$0xff]
    %v46 = vld [vmem:[%s0 + $0x40] sm:$0xff]
    %v47 = vld [vmem:[%s0 + $0x48] sm:$0xff]
    %v48 = vld [vmem:[%s0 + $0x50] sm:$0xff]
    %v49 = vld [vmem:[%s0 + $0x58] sm:$0xff]
    %v50 = vld [vmem:[%s0 + $0x60] sm:$0xff]
    %v51 = vld [vmem:[%s0 + $0x68] sm:$0xff]
    %v52 = vld [vmem:[%s0 + $0x70] sm:$0xff]
    %v53 = vld [vmem:[%s0 + $0x78] sm:$0xff]
    %v54 = vld [vmem:[%s1] sm:$0xff]
    %v55 = vld [vmem:[%s1 + $0x8] sm:$0xff]
    %v56 = vld [vmem:[%s1 + $0x10] sm:$0xff]
    %v57 = vld [vmem:[%s1 + $0x18] sm:$0xff]
    %v58 = vld [vmem:[%s1 + $0x20] sm:$0xff]
    %v59 = vld [vmem:[%s1 + $0x28] sm:$0xff]
    %v60 = vld [vmem:[%s1 + $0x30] sm:$0xff]
    %v61 = vld [vmem:[%s1 + $0x38] sm:$0xff]
    %v62 = vld [vmem:[%s1 + $0x40] sm:$0xff]
    %v63 = vld [vmem:[%s1 + $0x48] sm:$0xff]
    %v64 = vld [vmem:[%s1 + $0x50] sm:$0xff]
    %v65 = vld [vmem:[%s1 + $0x58] sm:$0xff]
    %v66 = vld [vmem:[%s1 + $0x60] sm:$0xff]
    %v67 = vld [vmem:[%s1 + $0x68] sm:$0xff]
    %v68 = vld [vmem:[%s1 + $0x70] sm:$0xff]
    %v69 = vld [vmem:[%s1 + $0x78] sm:$0xff]
    %vm70 = vcmask 64512
    %v72 = vsel %vm70, %v54, 0
    %v75 = vsel %vm70, %v55, 0
    %v78 = vsel %vm70, %v56, 0
    %v81 = vsel %vm70, %v57, 0
    %v84 = vsel %vm70, %v58, 0
    %v87 = vsel %vm70, %v59, 0
    %v90 = vsel %vm70, %v60, 0
    %v93 = vsel %vm70, %v61, 0
    %v96 = vsel %vm70, %v62, 0
    %v99 = vsel %vm70, %v63, 0
    %v102 = vsel %vm70, %v64, 0
    %v105 = vsel %vm70, %v65, 0
    %v108 = vsel %vm70, %v66, 0
    %v111 = vsel %vm70, %v67, 0
    %v114 = vsel %vm70, %v68, 0
    %v117 = vsel %vm70, %v69, 0
    %119 = vmatprep.subr.mxu0 0.0
    %120 = vmatpush1.msra.mxu0 %v36
    %121 = vmatprep.subr.mxu0 0.0
    %122 = vmatpush1.msra.mxu0 0.0
    %123 = vmatprep.subr.mxu0 0.0
    %124 = vmatpush1.msra.mxu0 0.0
    %125 = vmatprep.subr.mxu0 0.0
    %126 = vmatpush1.msra.mxu0 0.0
    %127 = vmatprep.subr.mxu0 0.0
    %128 = vmatpush1.msra.mxu0 0.0
    %129 = vmatprep.subr.mxu0 0.0
    %130 = vmatpush1.msra.mxu0 0.0
    %131 = vmatprep.subr.mxu0 0.0
    %132 = vmatpush1.msra.mxu0 0.0
    %133 = vmatprep.subr.mxu0 0.0
    %134 = vmatpush1.msra.mxu0 0.0
    %135 = vmatprep.subr.mxu0 0.0
    %136 = vmatpush1.msra.mxu0 0.0
    %137 = vmatprep.subr.mxu0 0.0
    %138 = vmatpush1.msra.mxu0 0.0
    %139 = vmatprep.subr.mxu0 0.0
    %140 = vmatpush1.msra.mxu0 0.0
    %141 = vmatprep.subr.mxu0 0.0
    %142 = vmatpush1.msra.mxu0 0.0
    %143 = vmatprep.subr.mxu0 0.0
    %144 = vmatpush1.msra.mxu0 0.0
    %145 = vmatprep.subr.mxu0 0.0
    %146 = vmatpush1.msra.mxu0 0.0
    %147 = vmatprep.subr.mxu0 0.0
    %148 = vmatpush1.msra.mxu0 0.0
    %149 = vmatprep.subr.mxu0 0.0
    %150 = vmatpush1.msra.mxu0 0.0
    %151 = vmatprep.subr.mxu0 0.0
    %152 = vmatpush1.msra.mxu0 0.0
    %153 = vmatprep.subr.mxu0 0.0
    %154 = vmatpush1.msra.mxu0 0.0
    %155 = vmatprep.subr.mxu0 0.0
    %156 = vmatpush1.msra.mxu0 0.0
    %157 = vmatprep.subr.mxu0 0.0
    %158 = vmatpush1.msra.mxu0 0.0
    %159 = vmatprep.subr.mxu0 0.0
    %160 = vmatpush1.msra.mxu0 0.0
    %161 = vmatprep.subr.mxu0 0.0
    %162 = vmatpush1.msra.mxu0 0.0
    %163 = vmatprep.subr.mxu0 0.0
    %164 = vmatpush1.msra.mxu0 0.0
    %165 = vmatprep.subr.mxu0 0.0
    %166 = vmatpush1.msra.mxu0 0.0
    %167 = vmatprep.subr.mxu0 0.0
    %168 = vmatpush1.msra.mxu0 0.0
    %169 = vmatprep.subr.mxu0 0.0
    %170 = vmatpush1.msra.mxu0 0.0
    %171 = vmatprep.subr.mxu0 0.0
    %172 = vmatpush1.msra.mxu0 0.0
    %173 = vmatprep.subr.mxu0 0.0
    %174 = vmatpush1.msra.mxu0 0.0
    %175 = vmatprep.subr.mxu0 0.0
    %176 = vmatpush1.msra.mxu0 0.0
    %177 = vmatprep.subr.mxu0 0.0
    %178 = vmatpush1.msra.mxu0 0.0
    %179 = vmatprep.subr.mxu0 0.0
    %180 = vmatpush1.msra.mxu0 0.0
    %181 = vmatprep.subr.mxu0 0.0
    %182 = vmatpush1.msra.mxu0 0.0
    %183 = vmatprep.mubr.f32.mxu0 0.0
    %184 = vmatmul.mubr.f32.gmra.mrb[0].mxu0 %v72
    %v185 = vpop.f32.mrb[0].mxu0
    %v186 = vadd.f32 0.0, %v185
    %v187 = vpop.f32.mrb[0].mxu0
    %188 = vmatprep.mubr.f32.mxu0 0.0
    %189 = vmatmul.mubr.f32.gmra.mrb[0].mxu0 %v75
    %v190 = vpop.f32.mrb[0].mxu0
    %v191 = vadd.f32 0.0, %v190
    %v192 = vpop.f32.mrb[0].mxu0
    %193 = vmatprep.mubr.f32.mxu0 0.0
    %194 = vmatmul.mubr.f32.gmra.mrb[0].mxu0 %v78
    %v195 = vpop.f32.mrb[0].mxu0
    %v196 = vadd.f32 0.0, %v195
    %v197 = vpop.f32.mrb[0].mxu0
    %198 = vmatprep.mubr.f32.mxu0 0.0
    %199 = vmatmul.mubr.f32.gmra.mrb[0].mxu0 %v81
    %v200 = vpop.f32.mrb[0].mxu0
    %v201 = vadd.f32 0.0, %v200
    %v202 = vpop.f32.mrb[0].mxu0
    %203 = vmatprep.mubr.f32.mxu0 0.0
    %204 = vmatmul.mubr.f32.gmra.mrb[0].mxu0 %v84
    %v205 = vpop.f32.mrb[0].mxu0
    %v206 = vadd.f32 0.0, %v205
    %v207 = vpop.f32.mrb[0].mxu0
    %208 = vmatprep.mubr.f32.mxu0 0.0
    %209 = vmatmul.mubr.f32.gmra.mrb[0].mxu0 %v87
    %v210 = vpop.f32.mrb[0].mxu0
    %v211 = vadd.f32 0.0, %v210
    %v212 = vpop.f32.mrb[0].mxu0
    %213 = vmatprep.mubr.f32.mxu0 0.0
    %214 = vmatmul.mubr.f32.gmra.mrb[0].mxu0 %v90
    %v215 = vpop.f32.mrb[0].mxu0
    %v216 = vadd.f32 0.0, %v215
    %v217 = vpop.f32.mrb[0].mxu0
    %218 = vmatprep.mubr.f32.mxu0 0.0
    %219 = vmatmul.mubr.f32.gmra.mrb[0].mxu0 %v93
    %v220 = vpop.f32.mrb[0].mxu0
    %v221 = vadd.f32 0.0, %v220
    %v222 = vpop.f32.mrb[0].mxu0
    %223 = vmatprep.mubr.f32.mxu0 0.0
    %224 = vmatmul.mubr.f32.gmra.mrb[0].mxu0 %v96
    %v225 = vpop.f32.mrb[0].mxu0
    %v226 = vadd.f32 0.0, %v225
    %v227 = vpop.f32.mrb[0].mxu0
    %228 = vmatprep.mubr.f32.mxu0 0.0
    %229 = vmatmul.mubr.f32.gmra.mrb[0].mxu0 %v99
    %v230 = vpop.f32.mrb[0].mxu0
    %v231 = vadd.f32 0.0, %v230
    %v232 = vpop.f32.mrb[0].mxu0
    %233 = vmatprep.mubr.f32.mxu0 0.0
    %234 = vmatmul.mubr.f32.gmra.mrb[0].mxu0 %v102
    %v235 = vpop.f32.mrb[0].mxu0
    %v236 = vadd.f32 0.0, %v235
    %v237 = vpop.f32.mrb[0].mxu0
    %238 = vmatprep.mubr.f32.mxu0 0.0
    %239 = vmatmul.mubr.f32.gmra.mrb[0].mxu0 %v105
    %v240 = vpop.f32.mrb[0].mxu0
    %v241 = vadd.f32 0.0, %v240
    %v242 = vpop.f32.mrb[0].mxu0
    %243 = vmatprep.mubr.f32.mxu0 0.0
    %244 = vmatmul.mubr.f32.gmra.mrb[0].mxu0 %v108
    %v245 = vpop.f32.mrb[0].mxu0
    %v246 = vadd.f32 0.0, %v245
    %v247 = vpop.f32.mrb[0].mxu0
    %248 = vmatprep.mubr.f32.mxu0 0.0
    %249 = vmatmul.mubr.f32.gmra.mrb[0].mxu0 %v111
    %v250 = vpop.f32.mrb[0].mxu0
    %v251 = vadd.f32 0.0, %v250
    %v252 = vpop.f32.mrb[0].mxu0
    %253 = vmatprep.mubr.f32.mxu0 0.0
    %254 = vmatmul.mubr.f32.gmra.mrb[0].mxu0 %v114
    %v255 = vpop.f32.mrb[0].mxu0
    %v256 = vadd.f32 0.0, %v255
    %v257 = vpop.f32.mrb[0].mxu0
    %258 = vmatprep.mubr.f32.mxu0 0.0
    %259 = vmatmul.mubr.f32.gmra.mrb[0].mxu0 %v117
    %v260 = vpop.f32.mrb[0].mxu0
    %v261 = vadd.f32 0.0, %v260
    %v262 = vpop.f32.mrb[0].mxu0
    %263 = vdwg.mxu0
    %vm264 = vcmask 195584
    %v266 = vsel %vm264, %v38, 0
    %v269 = vsel %vm264, %v39, 0
    %v272 = vsel %vm264, %v40, 0
    %v275 = vsel %vm264, %v41, 0
    %v278 = vsel %vm264, %v42, 0
    %v281 = vsel %vm264, %v43, 0
    %v284 = vsel %vm264, %v44, 0
    %v287 = vsel %vm264, %v45, 0
    %v290 = vsel %vm264, %v46, 0
    %v293 = vsel %vm264, %v47, 0
    %v296 = vsel %vm264, %v48, 0
    %v299 = vsel %vm264, %v49, 0
    %v302 = vsel %vm264, %v50, 0
    %v305 = vsel %vm264, %v51, 0
    %v308 = vsel %vm264, %v52, 0
    %v311 = vsel %vm264, %v53, 0
    %313 = vmatprep.subr.mxu0 0.0
    %314 = vmatpush1.msra.mxu0 %v33
    %315 = vmatprep.subr.mxu0 0.0
    %316 = vmatpush1.msra.mxu0 %v34
    %317 = vmatprep.subr.mxu0 0.0
    %318 = vmatpush1.msra.mxu0 %v35
    %319 = vmatprep.subr.mxu0 0.0
    %320 = vmatpush1.msra.mxu0 0.0
    %321 = vmatprep.subr.mxu0 0.0
    %322 = vmatpush1.msra.mxu0 0.0
    %323 = vmatprep.subr.mxu0 0.0
    %324 = vmatpush1.msra.mxu0 0.0
    %325 = vmatprep.subr.mxu0 0.0
    %326 = vmatpush1.msra.mxu0 0.0
    %327 = vmatprep.subr.mxu0 0.0
    %328 = vmatpush1.msra.mxu0 0.0
    %329 = vmatprep.subr.mxu0 0.0
    %330 = vmatpush1.msra.mxu0 0.0
    %331 = vmatprep.subr.mxu0 0.0
    %332 = vmatpush1.msra.mxu0 0.0
    %333 = vmatprep.subr.mxu0 0.0
    %334 = vmatpush1.msra.mxu0 0.0
    %335 = vmatprep.subr.mxu0 0.0
    %336 = vmatpush1.msra.mxu0 0.0
    %337 = vmatprep.subr.mxu0 0.0
    %338 = vmatpush1.msra.mxu0 0.0
    %339 = vmatprep.subr.mxu0 0.0
    %340 = vmatpush1.msra.mxu0 0.0
    %341 = vmatprep.subr.mxu0 0.0
    %342 = vmatpush1.msra.mxu0 0.0
    %343 = vmatprep.subr.mxu0 0.0
    %344 = vmatpush1.msra.mxu0 0.0
    %345 = vmatprep.subr.mxu0 0.0
    %346 = vmatpush1.msra.mxu0 0.0
    %347 = vmatprep.subr.mxu0 0.0
    %348 = vmatpush1.msra.mxu0 0.0
    %349 = vmatprep.subr.mxu0 0.0
    %350 = vmatpush1.msra.mxu0 0.0
    %351 = vmatprep.subr.mxu0 0.0
    %352 = vmatpush1.msra.mxu0 0.0
    %353 = vmatprep.subr.mxu0 0.0
    %354 = vmatpush1.msra.mxu0 0.0
    %355 = vmatprep.subr.mxu0 0.0
    %356 = vmatpush1.msra.mxu0 0.0
    %357 = vmatprep.subr.mxu0 0.0
    %358 = vmatpush1.msra.mxu0 0.0
    %359 = vmatprep.subr.mxu0 0.0
    %360 = vmatpush1.msra.mxu0 0.0
    %361 = vmatprep.subr.mxu0 0.0
    %362 = vmatpush1.msra.mxu0 0.0
    %363 = vmatprep.subr.mxu0 0.0
    %364 = vmatpush1.msra.mxu0 0.0
    %365 = vmatprep.subr.mxu0 0.0
    %366 = vmatpush1.msra.mxu0 0.0
    %367 = vmatprep.subr.mxu0 0.0
    %368 = vmatpush1.msra.mxu0 0.0
    %369 = vmatprep.subr.mxu0 0.0
    %370 = vmatpush1.msra.mxu0 0.0
    %371 = vmatprep.subr.mxu0 0.0
    %372 = vmatpush1.msra.mxu0 0.0
    %373 = vmatprep.subr.mxu0 0.0
    %374 = vmatpush1.msra.mxu0 0.0
    %375 = vmatprep.subr.mxu0 0.0
    %376 = vmatpush1.msra.mxu0 0.0
    %377 = vmatprep.mubr.f32.mxu0 0.0
    %378 = vmatmul.mubr.f32.gmra.mrb[0].mxu0 %v266
    %v379 = vpop.f32.mrb[0].mxu0
    %v380 = vadd.f32 %v186, %v379
    %v381 = vpop.f32.mrb[0].mxu0
    %382 = vmatprep.mubr.f32.mxu0 0.0
    %383 = vmatmul.mubr.f32.gmra.mrb[0].mxu0 %v269
    %v384 = vpop.f32.mrb[0].mxu0
    %v385 = vadd.f32 %v191, %v384
    %v386 = vpop.f32.mrb[0].mxu0
    %387 = vmatprep.mubr.f32.mxu0 0.0
    %388 = vmatmul.mubr.f32.gmra.mrb[0].mxu0 %v272
    %v389 = vpop.f32.mrb[0].mxu0
    %v390 = vadd.f32 %v196, %v389
    %v391 = vpop.f32.mrb[0].mxu0
    %392 = vmatprep.mubr.f32.mxu0 0.0
    %393 = vmatmul.mubr.f32.gmra.mrb[0].mxu0 %v275
    %v394 = vpop.f32.mrb[0].mxu0
    %v395 = vadd.f32 %v201, %v394
    %v396 = vpop.f32.mrb[0].mxu0
    %397 = vmatprep.mubr.f32.mxu0 0.0
    %398 = vmatmul.mubr.f32.gmra.mrb[0].mxu0 %v278
    %v399 = vpop.f32.mrb[0].mxu0
    %v400 = vadd.f32 %v206, %v399
    %v401 = vpop.f32.mrb[0].mxu0
    %402 = vmatprep.mubr.f32.mxu0 0.0
    %403 = vmatmul.mubr.f32.gmra.mrb[0].mxu0 %v281
    %v404 = vpop.f32.mrb[0].mxu0
    %v405 = vadd.f32 %v211, %v404
    %v406 = vpop.f32.mrb[0].mxu0
    %407 = vmatprep.mubr.f32.mxu0 0.0
    %408 = vmatmul.mubr.f32.gmra.mrb[0].mxu0 %v284
    %v409 = vpop.f32.mrb[0].mxu0
    %v410 = vadd.f32 %v216, %v409
    %v411 = vpop.f32.mrb[0].mxu0
    %412 = vmatprep.mubr.f32.mxu0 0.0
    %413 = vmatmul.mubr.f32.gmra.mrb[0].mxu0 %v287
    %v414 = vpop.f32.mrb[0].mxu0
    %v415 = vadd.f32 %v221, %v414
    %v416 = vpop.f32.mrb[0].mxu0
    %417 = vmatprep.mubr.f32.mxu0 0.0
    %418 = vmatmul.mubr.f32.gmra.mrb[0].mxu0 %v290
    %v419 = vpop.f32.mrb[0].mxu0
    %v420 = vadd.f32 %v226, %v419
    %v421 = vpop.f32.mrb[0].mxu0
    %422 = vmatprep.mubr.f32.mxu0 0.0
    %423 = vmatmul.mubr.f32.gmra.mrb[0].mxu0 %v293
    %v424 = vpop.f32.mrb[0].mxu0
    %v425 = vadd.f32 %v231, %v424
    %v426 = vpop.f32.mrb[0].mxu0
    %427 = vmatprep.mubr.f32.mxu0 0.0
    %428 = vmatmul.mubr.f32.gmra.mrb[0].mxu0 %v296
    %v429 = vpop.f32.mrb[0].mxu0
    %v430 = vadd.f32 %v236, %v429
    %v431 = vpop.f32.mrb[0].mxu0
    %432 = vmatprep.mubr.f32.mxu0 0.0
    %433 = vmatmul.mubr.f32.gmra.mrb[0].mxu0 %v299
    %v434 = vpop.f32.mrb[0].mxu0
    %v435 = vadd.f32 %v241, %v434
    %v436 = vpop.f32.mrb[0].mxu0
    %437 = vmatprep.mubr.f32.mxu0 0.0
    %438 = vmatmul.mubr.f32.gmra.mrb[0].mxu0 %v302
    %v439 = vpop.f32.mrb[0].mxu0
    %v440 = vadd.f32 %v246, %v439
    %v441 = vpop.f32.mrb[0].mxu0
    %442 = vmatprep.mubr.f32.mxu0 0.0
    %443 = vmatmul.mubr.f32.gmra.mrb[0].mxu0 %v305
    %v444 = vpop.f32.mrb[0].mxu0
    %v445 = vadd.f32 %v251, %v444
    %v446 = vpop.f32.mrb[0].mxu0
    %447 = vmatprep.mubr.f32.mxu0 0.0
    %448 = vmatmul.mubr.f32.gmra.mrb[0].mxu0 %v308
    %v449 = vpop.f32.mrb[0].mxu0
    %v450 = vadd.f32 %v256, %v449
    %v451 = vpop.f32.mrb[0].mxu0
    %452 = vmatprep.mubr.f32.mxu0 0.0
    %453 = vmatmul.mubr.f32.gmra.mrb[0].mxu0 %v311
    %v454 = vpop.f32.mrb[0].mxu0
    %v455 = vadd.f32 %v261, %v454
    %v456 = vpop.f32.mrb[0].mxu0
    %457 = vdwg.mxu0
    %v459 = vlaneseq
    %v460 = vshrl.u32 %v459, 7
    %v461 = vsub.s32 0, %v460
    %v462 = vrot.slane %v37, %v461
    %v464 = vadd.f32 %v380, %v462
    %v465 = vadd.f32 %v385, %v462
    %v466 = vadd.f32 %v390, %v462
    %v467 = vadd.f32 %v395, %v462
    %v468 = vadd.f32 %v400, %v462
    %v469 = vadd.f32 %v405, %v462
    %v470 = vadd.f32 %v410, %v462
    %v471 = vadd.f32 %v415, %v462
    %v472 = vadd.f32 %v420, %v462
    %v473 = vadd.f32 %v425, %v462
    %v474 = vadd.f32 %v430, %v462
    %v475 = vadd.f32 %v435, %v462
    %v476 = vadd.f32 %v440, %v462
    %v477 = vadd.f32 %v445, %v462
    %v478 = vadd.f32 %v450, %v462
    %v479 = vadd.f32 %v455, %v462
    %v480 = vmax.f32 %v464, 0.0
    %v481 = vmax.f32 %v465, 0.0
    %v482 = vmax.f32 %v466, 0.0
    %v483 = vmax.f32 %v467, 0.0
    %v484 = vmax.f32 %v468, 0.0
    %v485 = vmax.f32 %v469, 0.0
    %v486 = vmax.f32 %v470, 0.0
    %v487 = vmax.f32 %v471, 0.0
    %v488 = vmax.f32 %v472, 0.0
    %v489 = vmax.f32 %v473, 0.0
    %v490 = vmax.f32 %v474, 0.0
    %v491 = vmax.f32 %v475, 0.0
    %v492 = vmax.f32 %v476, 0.0
    %v493 = vmax.f32 %v477, 0.0
    %v494 = vmax.f32 %v478, 0.0
    %v495 = vmax.f32 %v479, 0.0
    %v496 = vld [vmem:[%s5] sm:$0xff]
    %v497 = vld [vmem:[%s5 + $0x8] sm:$0xff]
    %v498 = vld [vmem:[%s5 + $0x10] sm:$0xff]
    %v499 = vld [vmem:[%s5 + $0x18] sm:$0xff]
    %v500 = vld [vmem:[%s5 + $0x20] sm:$0xff]
    %v501 = vld [vmem:[%s5 + $0x28] sm:$0xff]
    %v502 = vld [vmem:[%s5 + $0x30] sm:$0xff]
    %v503 = vld [vmem:[%s5 + $0x38] sm:$0xff]
    %v504 = vld [vmem:[%s5 + $0x40] sm:$0xff]
    %v505 = vld [vmem:[%s5 + $0x48] sm:$0xff]
    %v506 = vld [vmem:[%s5 + $0x50] sm:$0xff]
    %v507 = vld [vmem:[%s5 + $0x58] sm:$0xff]
    %v508 = vld [vmem:[%s5 + $0x60] sm:$0xff]
    %v509 = vld [vmem:[%s5 + $0x68] sm:$0xff]
    %v510 = vld [vmem:[%s5 + $0x70] sm:$0xff]
    %v511 = vld [vmem:[%s5 + $0x78] sm:$0xff]
    %v512 = vld [vmem:[%s6] sm:$0x1]
    %v514 = vlaneseq
    %v515 = vshrl.u32 %v514, 7
    %v516 = vsub.s32 0, %v515
    %v517 = vrot.slane %v512, %v516
    %519 = vmatprep.subr.mxu0 0.0
    %520 = vmatpush1.msra.mxu0 %v496
    %521 = vmatprep.subr.mxu0 0.0
    %522 = vmatpush1.msra.mxu0 %v497
    %523 = vmatprep.subr.mxu0 0.0
    %524 = vmatpush1.msra.mxu0 %v498
    %525 = vmatprep.subr.mxu0 0.0
    %526 = vmatpush1.msra.mxu0 %v499
    %527 = vmatprep.subr.mxu0 0.0
    %528 = vmatpush1.msra.mxu0 %v500
    %529 = vmatprep.subr.mxu0 0.0
    %530 = vmatpush1.msra.mxu0 %v501
    %531 = vmatprep.subr.mxu0 0.0
    %532 = vmatpush1.msra.mxu0 %v502
    %533 = vmatprep.subr.mxu0 0.0
    %534 = vmatpush1.msra.mxu0 %v503
    %535 = vmatprep.subr.mxu0 0.0
    %536 = vmatpush1.msra.mxu0 %v504
    %537 = vmatprep.subr.mxu0 0.0
    %538 = vmatpush1.msra.mxu0 %v505
    %539 = vmatprep.subr.mxu0 0.0
    %540 = vmatpush1.msra.mxu0 %v506
    %541 = vmatprep.subr.mxu0 0.0
    %542 = vmatpush1.msra.mxu0 %v507
    %543 = vmatprep.subr.mxu0 0.0
    %544 = vmatpush1.msra.mxu0 %v508
    %545 = vmatprep.subr.mxu0 0.0
    %546 = vmatpush1.msra.mxu0 %v509
    %547 = vmatprep.subr.mxu0 0.0
    %548 = vmatpush1.msra.mxu0 %v510
    %549 = vmatprep.subr.mxu0 0.0
    %550 = vmatpush1.msra.mxu0 %v511
    %551 = vmatprep.subr.mxu0 0.0
    %552 = vmatpush1.msra.mxu0 0.0
    %553 = vmatprep.subr.mxu0 0.0
    %554 = vmatpush1.msra.mxu0 0.0
    %555 = vmatprep.subr.mxu0 0.0
    %556 = vmatpush1.msra.mxu0 0.0
    %557 = vmatprep.subr.mxu0 0.0
    %558 = vmatpush1.msra.mxu0 0.0
    %559 = vmatprep.subr.mxu0 0.0
    %560 = vmatpush1.msra.mxu0 0.0
    %561 = vmatprep.subr.mxu0 0.0
    %562 = vmatpush1.msra.mxu0 0.0
    %563 = vmatprep.subr.mxu0 0.0
    %564 = vmatpush1.msra.mxu0 0.0
    %565 = vmatprep.subr.mxu0 0.0
    %566 = vmatpush1.msra.mxu0 0.0
    %567 = vmatprep.subr.mxu0 0.0
    %568 = vmatpush1.msra.mxu0 0.0
    %569 = vmatprep.subr.mxu0 0.0
    %570 = vmatpush1.msra.mxu0 0.0
    %571 = vmatprep.subr.mxu0 0.0
    %572 = vmatpush1.msra.mxu0 0.0
    %573 = vmatprep.subr.mxu0 0.0
    %574 = vmatpush1.msra.mxu0 0.0
    %575 = vmatprep.subr.mxu0 0.0
    %576 = vmatpush1.msra.mxu0 0.0
    %577 = vmatprep.subr.mxu0 0.0
    %578 = vmatpush1.msra.mxu0 0.0
    %579 = vmatprep.subr.mxu0 0.0
    %580 = vmatpush1.msra.mxu0 0.0
    %581 = vmatprep.subr.mxu0 0.0
    %582 = vmatpush1.msra.mxu0 0.0
    %583 = vmatprep.mubr.f32.mxu0 0.0
    %584 = vmatmul.mubr.f32.gmra.mrb[0].mxu0 %v480
    %v585 = vpop.f32.mrb[0].mxu0
    %v586 = vadd.f32 %v517, %v585
    %v587 = vpop.f32.mrb[0].mxu0
    %588 = vmatprep.mubr.f32.mxu0 0.0
    %589 = vmatmul.mubr.f32.gmra.mrb[0].mxu0 %v481
    %v590 = vpop.f32.mrb[0].mxu0
    %v591 = vadd.f32 %v517, %v590
    %v592 = vpop.f32.mrb[0].mxu0
    %593 = vmatprep.mubr.f32.mxu0 0.0
    %594 = vmatmul.mubr.f32.gmra.mrb[0].mxu0 %v482
    %v595 = vpop.f32.mrb[0].mxu0
    %v596 = vadd.f32 %v517, %v595
    %v597 = vpop.f32.mrb[0].mxu0
    %598 = vmatprep.mubr.f32.mxu0 0.0
    %599 = vmatmul.mubr.f32.gmra.mrb[0].mxu0 %v483
    %v600 = vpop.f32.mrb[0].mxu0
    %v601 = vadd.f32 %v517, %v600
    %v602 = vpop.f32.mrb[0].mxu0
    %603 = vmatprep.mubr.f32.mxu0 0.0
    %604 = vmatmul.mubr.f32.gmra.mrb[0].mxu0 %v484
    %v605 = vpop.f32.mrb[0].mxu0
    %v606 = vadd.f32 %v517, %v605
    %v607 = vpop.f32.mrb[0].mxu0
    %608 = vmatprep.mubr.f32.mxu0 0.0
    %609 = vmatmul.mubr.f32.gmra.mrb[0].mxu0 %v485
    %v610 = vpop.f32.mrb[0].mxu0
    %v611 = vadd.f32 %v517, %v610
    %v612 = vpop.f32.mrb[0].mxu0
    %613 = vmatprep.mubr.f32.mxu0 0.0
    %614 = vmatmul.mubr.f32.gmra.mrb[0].mxu0 %v486
    %v615 = vpop.f32.mrb[0].mxu0
    %v616 = vadd.f32 %v517, %v615
    %v617 = vpop.f32.mrb[0].mxu0
    %618 = vmatprep.mubr.f32.mxu0 0.0
    %619 = vmatmul.mubr.f32.gmra.mrb[0].mxu0 %v487
    %v620 = vpop.f32.mrb[0].mxu0
    %v621 = vadd.f32 %v517, %v620
    %v622 = vpop.f32.mrb[0].mxu0
    %623 = vmatprep.mubr.f32.mxu0 0.0
    %624 = vmatmul.mubr.f32.gmra.mrb[0].mxu0 %v488
    %v625 = vpop.f32.mrb[0].mxu0
    %v626 = vadd.f32 %v517, %v625
    %v627 = vpop.f32.mrb[0].mxu0
    %628 = vmatprep.mubr.f32.mxu0 0.0
    %629 = vmatmul.mubr.f32.gmra.mrb[0].mxu0 %v489
    %v630 = vpop.f32.mrb[0].mxu0
    %v631 = vadd.f32 %v517, %v630
    %v632 = vpop.f32.mrb[0].mxu0
    %633 = vmatprep.mubr.f32.mxu0 0.0
    %634 = vmatmul.mubr.f32.gmra.mrb[0].mxu0 %v490
    %v635 = vpop.f32.mrb[0].mxu0
    %v636 = vadd.f32 %v517, %v635
    %v637 = vpop.f32.mrb[0].mxu0
    %638 = vmatprep.mubr.f32.mxu0 0.0
    %639 = vmatmul.mubr.f32.gmra.mrb[0].mxu0 %v491
    %v640 = vpop.f32.mrb[0].mxu0
    %v641 = vadd.f32 %v517, %v640
    %v642 = vpop.f32.mrb[0].mxu0
    %643 = vmatprep.mubr.f32.mxu0 0.0
    %644 = vmatmul.mubr.f32.gmra.mrb[0].mxu0 %v492
    %v645 = vpop.f32.mrb[0].mxu0
    %v646 = vadd.f32 %v517, %v645
    %v647 = vpop.f32.mrb[0].mxu0
    %648 = vmatprep.mubr.f32.mxu0 0.0
    %649 = vmatmul.mubr.f32.gmra.mrb[0].mxu0 %v493
    %v650 = vpop.f32.mrb[0].mxu0
    %v651 = vadd.f32 %v517, %v650
    %v652 = vpop.f32.mrb[0].mxu0
    %653 = vmatprep.mubr.f32.mxu0 0.0
    %654 = vmatmul.mubr.f32.gmra.mrb[0].mxu0 %v494
    %v655 = vpop.f32.mrb[0].mxu0
    %v656 = vadd.f32 %v517, %v655
    %v657 = vpop.f32.mrb[0].mxu0
    %658 = vmatprep.mubr.f32.mxu0 0.0
    %659 = vmatmul.mubr.f32.gmra.mrb[0].mxu0 %v495
    %v660 = vpop.f32.mrb[0].mxu0
    %v661 = vadd.f32 %v517, %v660
    %v662 = vpop.f32.mrb[0].mxu0
    %663 = vdwg.mxu0
    %v664 = vmax.f32 %v586, 0.0
    %v665 = vmax.f32 %v591, 0.0
    %v666 = vmax.f32 %v596, 0.0
    %v667 = vmax.f32 %v601, 0.0
    %v668 = vmax.f32 %v606, 0.0
    %v669 = vmax.f32 %v611, 0.0
    %v670 = vmax.f32 %v616, 0.0
    %v671 = vmax.f32 %v621, 0.0
    %v672 = vmax.f32 %v626, 0.0
    %v673 = vmax.f32 %v631, 0.0
    %v674 = vmax.f32 %v636, 0.0
    %v675 = vmax.f32 %v641, 0.0
    %v676 = vmax.f32 %v646, 0.0
    %v677 = vmax.f32 %v651, 0.0
    %v678 = vmax.f32 %v656, 0.0
    %v679 = vmax.f32 %v661, 0.0
    %v680 = vld [vmem:[%s7] sm:$0xff]
    %v681 = vld [vmem:[%s8] sm:$0xff]
    %683 = vset.pattern.permute.xlu0 0
    %684 = vperm.xlu0 %683, %v681
    %v685 = vpop.permute.xlu0 %684
    %687 = vmatprep.subr.mxu0 0.0
    %688 = vmatpush1.xpose.msra.mxu0 %v664
    %689 = vmatprep.subr.mxu0 0.0
    %690 = vmatpush1.xpose.msra.mxu0 %v665
    %691 = vmatprep.subr.mxu0 0.0
    %692 = vmatpush1.xpose.msra.mxu0 %v666
    %693 = vmatprep.subr.mxu0 0.0
    %694 = vmatpush1.xpose.msra.mxu0 %v667
    %695 = vmatprep.subr.mxu0 0.0
    %696 = vmatpush1.xpose.msra.mxu0 %v668
    %697 = vmatprep.subr.mxu0 0.0
    %698 = vmatpush1.xpose.msra.mxu0 %v669
    %699 = vmatprep.subr.mxu0 0.0
    %700 = vmatpush1.xpose.msra.mxu0 %v670
    %701 = vmatprep.subr.mxu0 0.0
    %702 = vmatpush1.xpose.msra.mxu0 %v671
    %703 = vmatprep.subr.mxu0 0.0
    %704 = vmatpush1.xpose.msra.mxu0 %v672
    %705 = vmatprep.subr.mxu0 0.0
    %706 = vmatpush1.xpose.msra.mxu0 %v673
    %707 = vmatprep.subr.mxu0 0.0
    %708 = vmatpush1.xpose.msra.mxu0 %v674
    %709 = vmatprep.subr.mxu0 0.0
    %710 = vmatpush1.xpose.msra.mxu0 %v675
    %711 = vmatprep.subr.mxu0 0.0
    %712 = vmatpush1.xpose.msra.mxu0 %v676
    %713 = vmatprep.subr.mxu0 0.0
    %714 = vmatpush1.xpose.msra.mxu0 %v677
    %715 = vmatprep.subr.mxu0 0.0
    %716 = vmatpush1.xpose.msra.mxu0 %v678
    %717 = vmatprep.subr.mxu0 0.0
    %718 = vmatpush1.xpose.msra.mxu0 %v679
    %719 = vmatprep.subr.mxu0 0.0
    %720 = vmatpush1.xpose.msra.mxu0 0.0
    %721 = vmatprep.subr.mxu0 0.0
    %722 = vmatpush1.xpose.msra.mxu0 0.0
    %723 = vmatprep.subr.mxu0 0.0
    %724 = vmatpush1.xpose.msra.mxu0 0.0
    %725 = vmatprep.subr.mxu0 0.0
    %726 = vmatpush1.xpose.msra.mxu0 0.0
    %727 = vmatprep.subr.mxu0 0.0
    %728 = vmatpush1.xpose.msra.mxu0 0.0
    %729 = vmatprep.subr.mxu0 0.0
    %730 = vmatpush1.xpose.msra.mxu0 0.0
    %731 = vmatprep.subr.mxu0 0.0
    %732 = vmatpush1.xpose.msra.mxu0 0.0
    %733 = vmatprep.subr.mxu0 0.0
    %734 = vmatpush1.xpose.msra.mxu0 0.0
    %735 = vmatprep.subr.mxu0 0.0
    %736 = vmatpush1.xpose.msra.mxu0 0.0
    %737 = vmatprep.subr.mxu0 0.0
    %738 = vmatpush1.xpose.msra.mxu0 0.0
    %739 = vmatprep.subr.mxu0 0.0
    %740 = vmatpush1.xpose.msra.mxu0 0.0
    %741 = vmatprep.subr.mxu0 0.0
    %742 = vmatpush1.xpose.msra.mxu0 0.0
    %743 = vmatprep.subr.mxu0 0.0
    %744 = vmatpush1.xpose.msra.mxu0 0.0
    %745 = vmatprep.subr.mxu0 0.0
    %746 = vmatpush1.xpose.msra.mxu0 0.0
    %747 = vmatprep.subr.mxu0 0.0
    %748 = vmatpush1.xpose.msra.mxu0 0.0
    %749 = vmatprep.subr.mxu0 0.0
    %750 = vmatpush1.xpose.msra.mxu0 0.0
    %751 = vmatprep.mubr.f32.mxu0 0.0
    %752 = vmatmul.mubr.f32.gmra.mrb[0].mxu0 %v680
    %v753 = vpop.f32.mrb[0].mxu0
    %v754 = vadd.f32 %v685, %v753
    %v755 = vpop.f32.mrb[0].mxu0
    %756 = vdwg.mxu0
    %757 = vst [vmem:[#allocation2] sm:$0xff] %v754
    // Predicated region
    $region38: #{tpu_custom_call.1} parent=1 // pred_check
      _
    $region39: #{tpu_custom_call.1} parent=1 // pred_check_branch
      %759 = sbr.rel (0) target = $region41
    $region40: #{tpu_custom_call.1} parent=1 // pred_region
      %s761 = ssub.s32 128, 128
      %762 = vsyncadd [#allocation3], %s761
      %s764 = sshll.u32 [#allocation2], 4
      %s765 = int_to_ptr.vmem [resolvable:$true] %s764
      %767 = dma.vmem_to_hbm [thread:$0]  %s765, 128, %s9, [#allocation3]
    $region41: #{tpu_custom_call.1} parent=1 // pred_fallthru
      _
    // Predicated region
    $region42: #{tpu_custom_call.1} parent=1 // pred_check
      _
    $region43: #{tpu_custom_call.1} parent=1 // pred_check_branch
      %769 = sbr.rel (0) target = $region45
    $region44: #{tpu_custom_call.1} parent=1 // pred_region
      %770 = dma.done [#allocation3], 128
    $region45: #{tpu_custom_call.1} parent=1 // pred_fallthru
      _
    %771 = vsyncpa [#allocation3], 1

</llo_original>
